<compile_context>
chip_gen: v7x
topology: tpu7x:2x2x1
jax: 0.10.0
libtpu: 0.0.40
codegen_flags: <defaults>
</compile_context>

<pallas_src>
import numpy as np
import jax
import jax.numpy as jnp
from jax.experimental import pallas as pl
from jax.experimental.pallas import tpu as pltpu


# ---------------------------------------------------------------------------
# helpers
# ---------------------------------------------------------------------------
def _round_up(x: int, m: int) -> int:
    return (x + m - 1) // m * m


def _pick_tile(total: int, candidates) -> int:
    for c in candidates:
        if total % c == 0:
            return c
    return total


# ---------------------------------------------------------------------------
# Pallas kernel: fused Linear + BatchNorm1d(train) + ReLU for one Cout tile
# ---------------------------------------------------------------------------
def _make_kernel(eps: float, inv_n: float):
    def kernel(x_ref, wT_ref, b_ref, g_ref, beta_ref, o_ref, acc_ref):
        k = pl.program_id(1)

        # --- init accumulator on first K step -------------------------------
        @pl.when(k == 0)
        def _():
            acc_ref[...] = jnp.zeros_like(acc_ref)

        # --- matmul partial: (N, tile_k) @ (tile_k, tile_c), bf16 in, f32 acc
        acc_ref[...] += jnp.dot(x_ref[...], wT_ref[...],
                                preferred_element_type=jnp.float32)

        # --- finalize: bias + BatchNorm1d (batch stats, biased var) + ReLU ---
        @pl.when(k == pl.num_programs(1) - 1)
        def _():
            y = acc_ref[...] + b_ref[...]                       # (N, tile_c)
            mean = jnp.sum(y, axis=0, keepdims=True) * inv_n    # per-feature batch mean
            xc = y - mean
            var = jnp.sum(xc * xc, axis=0, keepdims=True) * inv_n
            z = xc * jax.lax.rsqrt(var + eps) * g_ref[...] + beta_ref[...]
            o_ref[...] = jnp.maximum(z, 0.0)

    return kernel


# ---------------------------------------------------------------------------
# Wrapper: flatten/concat + padding to (8,128)-friendly shapes + pallas_call
# ---------------------------------------------------------------------------
def bottleneck_linear_forward(in_map, in_vec, lin_w, lin_b, bn_gamma, bn_beta,
                              eps: float = 1e-5):
    n = in_map.shape[0]
    x = jnp.concatenate([in_map.reshape(n, -1), in_vec], axis=1)      # (N, K)
    k_feat = x.shape[1]
    cout = lin_w.shape[0]

    k_pad = _round_up(k_feat, 128)
    cout_pad = _round_up(cout, 128)
    tile_k = _pick_tile(k_pad, (512, 384, 256, 128))
    tile_c = _pick_tile(cout_pad, (256, 128))

    # bf16 operands for the MXU (zero-padded -> padded region contributes nothing)
    x_p = jnp.pad(x.astype(jnp.bfloat16), ((0, 0), (0, k_pad - k_feat)))
    wT_p = jnp.pad(lin_w.T.astype(jnp.bfloat16),
                   ((0, k_pad - k_feat), (0, cout_pad - cout)))
    b_p = jnp.pad(lin_b.astype(jnp.float32), (0, cout_pad - cout)).reshape(1, cout_pad)
    g_p = jnp.pad(bn_gamma.astype(jnp.float32), (0, cout_pad - cout)).reshape(1, cout_pad)
    beta_p = jnp.pad(bn_beta.astype(jnp.float32), (0, cout_pad - cout)).reshape(1, cout_pad)

    grid = (cout_pad // tile_c, k_pad // tile_k)

    out = pl.pallas_call(
        _make_kernel(float(eps), 1.0 / float(n)),
        out_shape=jax.ShapeDtypeStruct((n, cout_pad), jnp.float32),
        grid_spec=pltpu.PrefetchScalarGridSpec(
            num_scalar_prefetch=0,
            grid=grid,
            in_specs=[
                pl.BlockSpec((n, tile_k), lambda j, k: (0, k)),        # x
                pl.BlockSpec((tile_k, tile_c), lambda j, k: (k, j)),   # W^T
                pl.BlockSpec((1, tile_c), lambda j, k: (0, j)),        # bias
                pl.BlockSpec((1, tile_c), lambda j, k: (0, j)),        # gamma
                pl.BlockSpec((1, tile_c), lambda j, k: (0, j)),        # beta
            ],
            out_specs=pl.BlockSpec((n, tile_c), lambda j, k: (0, j)),
            scratch_shapes=[pltpu.VMEM((n, tile_c), jnp.float32)],
        ),
        compiler_params=pltpu.CompilerParams(
            dimension_semantics=("parallel", "arbitrary")),
    )(x_p, wT_p, b_p, g_p, beta_p)

    return out[:, :cout].reshape(n, cout, 1, 1)                        # (N, Cout, 1, 1)


# ---------------------------------------------------------------------------
# Pure-JAX reference (module semantics: Linear -> BN1d(train) -> ReLU -> view)
# ---------------------------------------------------------------------------
def reference_forward(in_map, in_vec, lin_w, lin_b, bn_gamma, bn_beta,
                      eps: float = 1e-5, cast_dtype=None):
    n = in_map.shape[0]
    x = jnp.concatenate([in_map.reshape(n, -1), in_vec], axis=1)
    w = lin_w
    if cast_dtype is not None:
        # match the kernel's deliberate input quantization (bf16 operands, f32 math)
        x = x.astype(cast_dtype).astype(jnp.float32)
        w = w.astype(cast_dtype).astype(jnp.float32)
    y = x @ w.T + lin_b
    mean = jnp.mean(y, axis=0, keepdims=True)
    var = jnp.mean((y - mean) ** 2, axis=0, keepdims=True)
    z = (y - mean) * jax.lax.rsqrt(var + eps) * bn_gamma + bn_beta
    z = jnp.maximum(z, 0.0)
    return z.reshape(n, -1, 1, 1)


if __name__ == "__main__":
    # small shapes consistent with the module's forward:
    # inMap (N, C, H, W) flattened + inVec (N, V) -> inChannels = C*H*W + V
    N, C, H, W = 8, 4, 16, 16
    vec_dim = 32
    out_channels = 32
    in_features = C * H * W + vec_dim                        # 1056

    key = jax.random.PRNGKey(0)
    k1, k2, k3, k4 = jax.random.split(key, 4)

    in_map = jax.random.normal(k1, (N, C, H, W), jnp.float32)
    in_vec = jax.random.normal(k2, (N, vec_dim), jnp.float32)

    # deterministic parameter init matching the module's __init__
    w_bound = float(np.sqrt(6.0 / in_features))              # kaiming_uniform, fan_in, relu
    lin_w = jax.random.uniform(k3, (out_channels, in_features), jnp.float32,
                               -w_bound, w_bound)
    b_bound = float(1.0 / np.sqrt(in_features))               # default nn.Linear bias init
    lin_b = jax.random.uniform(k4, (out_channels,), jnp.float32, -b_bound, b_bound)
    bn_gamma = jnp.ones((out_channels,), jnp.float32)          # BatchNorm1d defaults
    bn_beta = jnp.zeros((out_channels,), jnp.float32)

    out = bottleneck_linear_forward(in_map, in_vec, lin_w, lin_b, bn_gamma, bn_beta)
    out = jax.block_until_ready(out)
    assert out.shape == (N, out_channels, 1, 1)

    # reference with the same bf16 operand quantization as the kernel, so the check
    # isolates kernel correctness (BN amplifies tiny matmul-rounding differences)
    ref = jax.block_until_ready(
        reference_forward(in_map, in_vec, lin_w, lin_b, bn_gamma, bn_beta,
                          cast_dtype=jnp.bfloat16))
    np.testing.assert_allclose(np.asarray(out), np.asarray(ref), rtol=1e-2, atol=1e-2)

    print("KERNEL_OK")
</pallas_src>

<mosaic_0001>
module attributes {stable_mosaic.version = 11 : i64} {
  func.func @kernel(%arg0: i32, %arg1: i32, %arg2: memref<8x384xbf16, #tpu.memory_space<vmem>>, %arg3: memref<384x128xbf16, #tpu.memory_space<vmem>>, %arg4: memref<1x128xf32, #tpu.memory_space<vmem>>, %arg5: memref<1x128xf32, #tpu.memory_space<vmem>>, %arg6: memref<1x128xf32, #tpu.memory_space<vmem>>, %arg7: memref<8x128xf32, #tpu.memory_space<vmem>>, %arg8: memref<8x128xf32, #tpu.memory_space<vmem>>) attributes {dimension_semantics = [#tpu.dimension_semantics<parallel>, #tpu.dimension_semantics<arbitrary>], iteration_bounds = array<i64: 1, 3>, scalar_prefetch = 0 : i64, scratch_operands = 1 : i64, tpu.core_type = #tpu.core_type<tc>, window_params = [{transform_indices = @transform_0, window_bounds = array<i64: 8, 384>}, {transform_indices = @transform_1, window_bounds = array<i64: 384, 128>}, {transform_indices = @transform_2, window_bounds = array<i64: 1, 128>}, {transform_indices = @transform_3, window_bounds = array<i64: 1, 128>}, {transform_indices = @transform_4, window_bounds = array<i64: 1, 128>}, {transform_indices = @transform_5, window_bounds = array<i64: 8, 128>}]} {
    %c0_i32 = arith.constant 0 : i32
    %0 = arith.cmpi eq, %arg1, %c0_i32 : i32
    %1 = arith.extui %0 : i1 to i32
    %c0_i32_0 = arith.constant 0 : i32
    %2 = arith.cmpi ne, %1, %c0_i32_0 : i32
    scf.if %2 {
      %cst_9 = arith.constant 0.000000e+00 : f32
      %12 = vector.broadcast %cst_9 : f32 to vector<8x128xf32>
      %c0_10 = arith.constant 0 : index
      %c0_11 = arith.constant 0 : index
      %13 = vector.load %arg8[%c0_10, %c0_11] : memref<8x128xf32, #tpu.memory_space<vmem>>, vector<8x128xf32>
      tpu.vector_store %arg8[%c0_10, %c0_11], %12 {strides = array<i32>} : memref<8x128xf32, #tpu.memory_space<vmem>>, vector<8x128xf32>,
    } else {
    }
    %c0 = arith.constant 0 : index
    %c0_1 = arith.constant 0 : index
    %3 = vector.load %arg8[%c0, %c0_1] : memref<8x128xf32, #tpu.memory_space<vmem>>, vector<8x128xf32>
    %c0_2 = arith.constant 0 : index
    %c0_3 = arith.constant 0 : index
    %4 = vector.load %arg2[%c0_2, %c0_3] : memref<8x384xbf16, #tpu.memory_space<vmem>>, vector<8x384xbf16>
    %c0_4 = arith.constant 0 : index
    %c0_5 = arith.constant 0 : index
    %5 = vector.load %arg3[%c0_4, %c0_5] : memref<384x128xbf16, #tpu.memory_space<vmem>>, vector<384x128xbf16>
    %cst = arith.constant dense<0.000000e+00> : vector<8x128xf32>
    %6 = tpu.matmul %4, %5, %cst {dimension_numbers = #tpu.dot_dimension_numbers<[1], [0], [0], [1], [0, 0, 1, 1], [], []>} : vector<8x384xbf16>, vector<384x128xbf16>, vector<8x128xf32> -> vector<8x128xf32>
    %7 = arith.addf %3, %6 : vector<8x128xf32>
    %c0_6 = arith.constant 0 : index
    %c0_7 = arith.constant 0 : index
    %8 = vector.load %arg8[%c0_6, %c0_7] : memref<8x128xf32, #tpu.memory_space<vmem>>, vector<8x128xf32>
    tpu.vector_store %arg8[%c0_6, %c0_7], %7 {strides = array<i32>} : memref<8x128xf32, #tpu.memory_space<vmem>>, vector<8x128xf32>,
    %c2_i32 = arith.constant 2 : i32
    %9 = arith.cmpi eq, %arg1, %c2_i32 : i32
    %10 = arith.extui %9 : i1 to i32
    %c0_i32_8 = arith.constant 0 : i32
    %11 = arith.cmpi ne, %10, %c0_i32_8 : i32
    scf.if %11 {
      %c0_9 = arith.constant 0 : index
      %c0_10 = arith.constant 0 : index
      %12 = vector.load %arg8[%c0_9, %c0_10] : memref<8x128xf32, #tpu.memory_space<vmem>>, vector<8x128xf32>
      %c0_11 = arith.constant 0 : index
      %c0_12 = arith.constant 0 : index
      %13 = vector.load %arg4[%c0_11, %c0_12] : memref<1x128xf32, #tpu.memory_space<vmem>>, vector<1x128xf32>
      %14 = vector.broadcast %13 : vector<1x128xf32> to vector<8x128xf32>
      %15 = arith.addf %12, %14 : vector<8x128xf32>
      %cst_13 = arith.constant dense<0.000000e+00> : vector<128xf32>
      %16 = vector.multi_reduction <add>, %15, %cst_13 [0] : vector<8x128xf32> to vector<128xf32>
      %17 = vector.shape_cast %16 : vector<128xf32> to vector<1x128xf32>
      %cst_14 = arith.constant 1.250000e-01 : f32
      %18 = vector.broadcast %cst_14 : f32 to vector<1x128xf32>
      %19 = arith.mulf %17, %18 : vector<1x128xf32>
      %20 = vector.broadcast %19 : vector<1x128xf32> to vector<8x128xf32>
      %21 = arith.subf %15, %20 : vector<8x128xf32>
      %22 = arith.mulf %21, %21 : vector<8x128xf32>
      %cst_15 = arith.constant dense<0.000000e+00> : vector<128xf32>
      %23 = vector.multi_reduction <add>, %22, %cst_15 [0] : vector<8x128xf32> to vector<128xf32>
      %24 = vector.shape_cast %23 : vector<128xf32> to vector<1x128xf32>
      %cst_16 = arith.constant 1.250000e-01 : f32
      %25 = vector.broadcast %cst_16 : f32 to vector<1x128xf32>
      %26 = arith.mulf %24, %25 : vector<1x128xf32>
      %cst_17 = arith.constant 9.99999974E-6 : f32
      %27 = vector.broadcast %cst_17 : f32 to vector<1x128xf32>
      %28 = arith.addf %26, %27 : vector<1x128xf32>
      %29 = math.rsqrt %28 : vector<1x128xf32>
      %30 = vector.broadcast %29 : vector<1x128xf32> to vector<8x128xf32>
      %31 = arith.mulf %21, %30 : vector<8x128xf32>
      %c0_18 = arith.constant 0 : index
      %c0_19 = arith.constant 0 : index
      %32 = vector.load %arg5[%c0_18, %c0_19] : memref<1x128xf32, #tpu.memory_space<vmem>>, vector<1x128xf32>
      %33 = vector.broadcast %32 : vector<1x128xf32> to vector<8x128xf32>
      %34 = arith.mulf %31, %33 : vector<8x128xf32>
      %c0_20 = arith.constant 0 : index
      %c0_21 = arith.constant 0 : index
      %35 = vector.load %arg6[%c0_20, %c0_21] : memref<1x128xf32, #tpu.memory_space<vmem>>, vector<1x128xf32>
      %36 = vector.broadcast %35 : vector<1x128xf32> to vector<8x128xf32>
      %37 = arith.addf %34, %36 : vector<8x128xf32>
      %cst_22 = arith.constant 0.000000e+00 : f32
      %38 = vector.broadcast %cst_22 : f32 to vector<8x128xf32>
      %39 = arith.maximumf %37, %38 : vector<8x128xf32>
      %c0_23 = arith.constant 0 : index
      %c0_24 = arith.constant 0 : index
      %40 = vector.load %arg7[%c0_23, %c0_24] : memref<8x128xf32, #tpu.memory_space<vmem>>, vector<8x128xf32>
      tpu.vector_store %arg7[%c0_23, %c0_24], %39 {strides = array<i32>} : memref<8x128xf32, #tpu.memory_space<vmem>>, vector<8x128xf32>,
    } else {
    }
    return
  }
  func.func @transform_0(%arg0: i32, %arg1: i32) -> (i32, i32) {
    %c0_i32 = arith.constant 0 : i32
    %c0_i32_0 = arith.constant 0 : i32
    return %c0_i32, %arg1 : i32, i32
  }
  func.func @transform_1(%arg0: i32, %arg1: i32) -> (i32, i32) {
    %c0_i32 = arith.constant 0 : i32
    return %arg1, %arg0 : i32, i32
  }
  func.func @transform_2(%arg0: i32, %arg1: i32) -> (i32, i32) {
    %c0_i32 = arith.constant 0 : i32
    %c0_i32_0 = arith.constant 0 : i32
    return %c0_i32, %arg0 : i32, i32
  }
  func.func @transform_3(%arg0: i32, %arg1: i32) -> (i32, i32) {
    %c0_i32 = arith.constant 0 : i32
    %c0_i32_0 = arith.constant 0 : i32
    return %c0_i32, %arg0 : i32, i32
  }
  func.func @transform_4(%arg0: i32, %arg1: i32) -> (i32, i32) {
    %c0_i32 = arith.constant 0 : i32
    %c0_i32_0 = arith.constant 0 : i32
    return %c0_i32, %arg0 : i32, i32
  }
  func.func @transform_5(%arg0: i32, %arg1: i32) -> (i32, i32) {
    %c0_i32 = arith.constant 0 : i32
    %c0_i32_0 = arith.constant 0 : i32
    return %c0_i32, %arg0 : i32, i32
  }
}

</mosaic_0001>

<llo_original>
// kernel: tpu_custom_call.1
$region0: #{tpu_custom_call.1}
  #allocation0 [shape = 'u32[]', space=smem, size = 0x4, offset = 0x4, fixed_abs, tag = 'smem constant byte address 0x4 - core index']
  #allocation1 [shape = 'u32[144,128]{1,0:T(1,128)}', space=vmem, size = 0x12000, scoped, tag = 'internal scratch']
  #allocation2 [shape = 'f32[8,128]{1,0:T(8,128)}', space=vmem, size = 0x1000, scoped, tag = 'scratch operand']
  %s0 = inlined_call_operand.hbm [shape: bf16[8,1152], index: 0, kind: input, shape index: {}]
  %s1 = inlined_call_operand.hbm [shape: bf16[1152,128], index: 1, kind: input, shape index: {}]
  %s2 = inlined_call_operand.vmem [shape: f32[1,128], index: 2, kind: input, shape index: {}]
  %s3 = inlined_call_operand.vmem [shape: f32[1,128], index: 3, kind: input, shape index: {}]
  %s4 = inlined_call_operand.vmem [shape: f32[1,128], index: 4, kind: input, shape index: {}]
  %s5 = inlined_call_operand.hbm [shape: f32[8,128], index: 5, kind: output, shape index: {}]
  %s6 = sld [smem:[#allocation0]]
  $region69: #{tpu_custom_call.1} parent=0
    _
  %s8 = ssub.s32 1, %s6
  %s9 = scalar_select 0, %s8, %s6
  $region1: #{tpu_custom_call.1} parent=0
    #allocation3 [shape = 'u8[12288]{0}', space=vmem, size = 0x3000, scoped, tag = 'input window, operand 0']
    #allocation4 [shape = 's32[2]{0}', space=sflag, size = 0x8, scoped, tag = 'scoped memory for tpu_custom_call.1']
    #allocation5 [shape = 's32[2]{0}', space=sflag, size = 0x8, scoped, tag = 'scoped memory for tpu_custom_call.1']
    #allocation6 [shape = 'u8[196608]{0}', space=vmem, size = 0x30000, scoped, tag = 'input window, operand 1']
    #allocation7 [shape = 's32[2]{0}', space=sflag, size = 0x8, scoped, tag = 'scoped memory for tpu_custom_call.1']
    #allocation8 [shape = 'u8[4096]{0}', space=vmem, size = 0x1000, scoped, tag = 'output window, operand 0, single buffered']
    %10 = vsyncpa [#allocation4], 0
    %s11 = scalar_lea.sflag [#allocation4], 1
    %12 = vsyncpa %s11, 0
    %13 = vsyncpa [#allocation7], 0
    %s14 = scalar_lea.sflag [#allocation7], 1
    %15 = vsyncpa %s14, 0
    %16 = vsyncpa [#allocation5], 0
    loop: start=0, step=1, limit=5
    $region2: #{tpu_custom_call.1} parent=1 // loop_pre_header
      _
    $region3: #{tpu_custom_call.1} parent=1 // loop_header
      %s18 = sphi 0, %s22
      %p19 = scmp.ge.s32.totalorder %s18, 5
      %s25 = sphi 0, %s37
      %s26 = sphi 0, %s33
      %s27 = sphi 0, %s25
      %s28 = sphi 0, %s26
      %s29 = sphi 0, %s27
      %s30 = sphi 0, %s28
      %s40 = sphi 0, %s42
      %s43 = sphi 0, %s40
      %s44 = sphi 0, %s43
      %s60 = sphi 0, %s44
      %s68 = sphi 0, %s70
      %s71 = sphi 0, %s68
      %s72 = sphi 0, %s71
      %s88 = sphi 0, %s72
      %s94 = sphi 0, %s96
      %s97 = sphi 0, %s94
      %s98 = sphi 0, %s97
      %s114 = sphi 0, %s98
      %s120 = sphi 0, %s122
      %s123 = sphi 0, %s120
      %s124 = sphi 0, %s123
      %s140 = sphi 0, %s124
      %s146 = sphi 0, %s148
      %s149 = sphi 0, %s146
      %s150 = sphi 0, %s149
      %s166 = sphi 0, %s150
      %s172 = sphi 0, %s174
      %s175 = sphi 0, %s172
      %s176 = sphi 0, %s175
      %s192 = sphi 0, %s176
    $region4: #{tpu_custom_call.1} parent=1 // loop_header_branch
      %21 = sbr.rel (%p19) target = $region8
    $region5: #{tpu_custom_call.1} parent=1 // loop_body
      %s23 = ssub.s32 %s18, 1
      %s24 = ssub.s32 %s18, 2
      %s31 = sadd.s32 1, %s26
      %p32 = scmp.ge.s32.totalorder %s31, 3
      %s33 = scalar_select %p32, 0, %s31
      %s34 = sadd.s32 1, %s25
      %s35 = scalar_select %p32, %s34, %s25
      %p36 = scmp.ge.s32.totalorder %s35, 1
      %s37 = scalar_select %p36, 0, %s35
      %s38 = ssub.s32 %s26, %s33
      %p39 = scmp.eq.s32.totalorder %s38, 0
      %s41 = sadd.s32 %s40, 1
      %s42 = scalar_select %p39, %s40, %s41
      %p45 = pneg %p39
      %p46 = scmp.eq.s32.totalorder %s18, 2
      %p47 = por %p45, %p46
      %p48 = scmp.ne.s32.totalorder %s40, %s43
      %p49 = scmp.eq.s32.totalorder %s18, 0
      %p50 = por %p48, %p49
      %p51 = scmp.ne.s32.totalorder %s40, %s43
      %p52 = scmp.eq.s32.totalorder %s23, 2
      %p53 = por %p51, %p52
      %p54 = scmp.ne.s32.totalorder %s43, %s44
      %p55 = scmp.eq.s32.totalorder %s23, 0
      %p56 = por %p54, %p55
      %p57 = scmp.ne.s32.totalorder %s43, %s44
      %p58 = scmp.eq.s32.totalorder %s24, 2
      %p59 = por %p57, %p58
      %p61 = scmp.ne.s32.totalorder %s44, %s60
      %p62 = scmp.eq.s32.totalorder %s24, 0
      %p63 = por %p61, %p62
      %s64 = ssub.s32 %s26, %s33
      %s65 = ssub.s32 %s25, %s37
      %s66 = sor.u32 %s64, %s65
      %p67 = scmp.eq.s32.totalorder %s66, 0
      %s69 = sadd.s32 %s68, 1
      %s70 = scalar_select %p67, %s68, %s69
      %p73 = pneg %p67
      %p74 = scmp.eq.s32.totalorder %s18, 2
      %p75 = por %p73, %p74
      %p76 = scmp.ne.s32.totalorder %s68, %s71
      %p77 = scmp.eq.s32.totalorder %s18, 0
      %p78 = por %p76, %p77
      %p79 = scmp.ne.s32.totalorder %s68, %s71
      %p80 = scmp.eq.s32.totalorder %s23, 2
      %p81 = por %p79, %p80
      %p82 = scmp.ne.s32.totalorder %s71, %s72
      %p83 = scmp.eq.s32.totalorder %s23, 0
      %p84 = por %p82, %p83
      %p85 = scmp.ne.s32.totalorder %s71, %s72
      %p86 = scmp.eq.s32.totalorder %s24, 2
      %p87 = por %p85, %p86
      %p89 = scmp.ne.s32.totalorder %s72, %s88
      %p90 = scmp.eq.s32.totalorder %s24, 0
      %p91 = por %p89, %p90
      %s92 = ssub.s32 %s25, %s37
      %p93 = scmp.eq.s32.totalorder %s92, 0
      %s95 = sadd.s32 %s94, 1
      %s96 = scalar_select %p93, %s94, %s95
      %p99 = pneg %p93
      %p100 = scmp.eq.s32.totalorder %s18, 2
      %p101 = por %p99, %p100
      %p102 = scmp.ne.s32.totalorder %s94, %s97
      %p103 = scmp.eq.s32.totalorder %s18, 0
      %p104 = por %p102, %p103
      %p105 = scmp.ne.s32.totalorder %s94, %s97
      %p106 = scmp.eq.s32.totalorder %s23, 2
      %p107 = por %p105, %p106
      %p108 = scmp.ne.s32.totalorder %s97, %s98
      %p109 = scmp.eq.s32.totalorder %s23, 0
      %p110 = por %p108, %p109
      %p111 = scmp.ne.s32.totalorder %s97, %s98
      %p112 = scmp.eq.s32.totalorder %s24, 2
      %p113 = por %p111, %p112
      %p115 = scmp.ne.s32.totalorder %s98, %s114
      %p116 = scmp.eq.s32.totalorder %s24, 0
      %p117 = por %p115, %p116
      %s118 = ssub.s32 %s25, %s37
      %p119 = scmp.eq.s32.totalorder %s118, 0
      %s121 = sadd.s32 %s120, 1
      %s122 = scalar_select %p119, %s120, %s121
      %p125 = pneg %p119
      %p126 = scmp.eq.s32.totalorder %s18, 2
      %p127 = por %p125, %p126
      %p128 = scmp.ne.s32.totalorder %s120, %s123
      %p129 = scmp.eq.s32.totalorder %s18, 0
      %p130 = por %p128, %p129
      %p131 = scmp.ne.s32.totalorder %s120, %s123
      %p132 = scmp.eq.s32.totalorder %s23, 2
      %p133 = por %p131, %p132
      %p134 = scmp.ne.s32.totalorder %s123, %s124
      %p135 = scmp.eq.s32.totalorder %s23, 0
      %p136 = por %p134, %p135
      %p137 = scmp.ne.s32.totalorder %s123, %s124
      %p138 = scmp.eq.s32.totalorder %s24, 2
      %p139 = por %p137, %p138
      %p141 = scmp.ne.s32.totalorder %s124, %s140
      %p142 = scmp.eq.s32.totalorder %s24, 0
      %p143 = por %p141, %p142
      %s144 = ssub.s32 %s25, %s37
      %p145 = scmp.eq.s32.totalorder %s144, 0
      %s147 = sadd.s32 %s146, 1
      %s148 = scalar_select %p145, %s146, %s147
      %p151 = pneg %p145
      %p152 = scmp.eq.s32.totalorder %s18, 2
      %p153 = por %p151, %p152
      %p154 = scmp.ne.s32.totalorder %s146, %s149
      %p155 = scmp.eq.s32.totalorder %s18, 0
      %p156 = por %p154, %p155
      %p157 = scmp.ne.s32.totalorder %s146, %s149
      %p158 = scmp.eq.s32.totalorder %s23, 2
      %p159 = por %p157, %p158
      %p160 = scmp.ne.s32.totalorder %s149, %s150
      %p161 = scmp.eq.s32.totalorder %s23, 0
      %p162 = por %p160, %p161
      %p163 = scmp.ne.s32.totalorder %s149, %s150
      %p164 = scmp.eq.s32.totalorder %s24, 2
      %p165 = por %p163, %p164
      %p167 = scmp.ne.s32.totalorder %s150, %s166
      %p168 = scmp.eq.s32.totalorder %s24, 0
      %p169 = por %p167, %p168
      %s170 = ssub.s32 %s25, %s37
      %p171 = scmp.eq.s32.totalorder %s170, 0
      %s173 = sadd.s32 %s172, 1
      %s174 = scalar_select %p171, %s172, %s173
      %p177 = pneg %p171
      %p178 = scmp.eq.s32.totalorder %s18, 2
      %p179 = por %p177, %p178
      %p180 = scmp.ne.s32.totalorder %s172, %s175
      %p181 = scmp.eq.s32.totalorder %s18, 0
      %p182 = por %p180, %p181
      %p183 = scmp.ne.s32.totalorder %s172, %s175
      %p184 = scmp.eq.s32.totalorder %s23, 2
      %p185 = por %p183, %p184
      %p186 = scmp.ne.s32.totalorder %s175, %s176
      %p187 = scmp.eq.s32.totalorder %s23, 0
      %p188 = por %p186, %p187
      %p189 = scmp.ne.s32.totalorder %s175, %s176
      %p190 = scmp.eq.s32.totalorder %s24, 2
      %p191 = por %p189, %p190
      %p193 = scmp.ne.s32.totalorder %s176, %s192
      %p194 = scmp.eq.s32.totalorder %s24, 0
      %p195 = por %p193, %p194
      %p196 = scmp.le.s32.totalorder 1, %s18
      %p197 = scmp.lt.s32.totalorder %s18, 4
      %p198 = pnand %p196, %p197
      %p199 = pneg %p198
      // Predicated region
      $region9: #{tpu_custom_call.1} parent=5 // pred_check
        _
      $region10: #{tpu_custom_call.1} parent=5 // pred_check_branch
        %201 = sbr.rel (%p198) target = $region12
      $region11: #{tpu_custom_call.1} parent=5 // pred_region
        %s202 = ssub.s32 %s18, 1
        // Predicated region
        $region13: #{tpu_custom_call.1} parent=11 // pred_check
          %p203 = pneg %p110
        $region14: #{tpu_custom_call.1} parent=11 // pred_check_branch
          %205 = sbr.rel (%p203) target = $region16
        $region15: #{tpu_custom_call.1} parent=11 // pred_region
          %p206 = scmp.lt.s32.totalorder %s27, 0
          %s207 = scalar_select %p206, %s27, 0
          %s208 = scalar_lea.vmem %s2, %s207
        $region16: #{tpu_custom_call.1} parent=11 // pred_fallthru
          _
        // Predicated region
        $region17: #{tpu_custom_call.1} parent=11 // pred_check
          %p209 = pneg %p136
        $region18: #{tpu_custom_call.1} parent=11 // pred_check_branch
          %211 = sbr.rel (%p209) target = $region20
        $region19: #{tpu_custom_call.1} parent=11 // pred_region
          %p212 = scmp.lt.s32.totalorder %s27, 0
          %s213 = scalar_select %p212, %s27, 0
          %s214 = scalar_lea.vmem %s3, %s213
        $region20: #{tpu_custom_call.1} parent=11 // pred_fallthru
          _
        // Predicated region
        $region21: #{tpu_custom_call.1} parent=11 // pred_check
          %p215 = pneg %p162
        $region22: #{tpu_custom_call.1} parent=11 // pred_check_branch
          %217 = sbr.rel (%p215) target = $region24
        $region23: #{tpu_custom_call.1} parent=11 // pred_region
          %p218 = scmp.lt.s32.totalorder %s27, 0
          %s219 = scalar_select %p218, %s27, 0
          %s220 = scalar_lea.vmem %s4, %s219
        $region24: #{tpu_custom_call.1} parent=11 // pred_fallthru
          _
      $region12: #{tpu_custom_call.1} parent=5 // pred_fallthru
        _
      %p221 = scmp.lt.s32.totalorder %s18, 3
      // Predicated region
      $region25: #{tpu_custom_call.1} parent=5 // pred_check
        %p222 = pneg %p221
      $region26: #{tpu_custom_call.1} parent=5 // pred_check_branch
        %224 = sbr.rel (%p222) target = $region28
      $region27: #{tpu_custom_call.1} parent=5 // pred_region
        // Predicated region
        $region29: #{tpu_custom_call.1} parent=27 // pred_check
          %p225 = pneg %p50
        $region30: #{tpu_custom_call.1} parent=27 // pred_check_branch
          %227 = sbr.rel (%p225) target = $region32
        $region31: #{tpu_custom_call.1} parent=27 // pred_region
          %s228 = sand.u32 %s40, 1
          %s229 = scalar_lea.sflag [#allocation4], %s228
          %s230 = sand.u32 %s40, 1
          %s231 = smul.addr %s230, 12
          %s232 = scalar_lea.vmem [#allocation3], %s231
          %s233 = smul.u32 3, %s26
          %s235 = ssub.s32 192, 192
          %236 = vsyncadd %s229, %s235
          %s237 = smul.addr %s233, 64
          %s238 = scalar_lea.hbm %s0, %s237
          %s240 = sshll.u32 %s232, 4
          %s241 = int_to_ptr.vmem [resolvable:$true] %s240
          %243 = dma.hbm_to_vmem [thread:$0]  %s238, 192, %s241, %s229
        $region32: #{tpu_custom_call.1} parent=27 // pred_fallthru
          _
        // Predicated region
        $region33: #{tpu_custom_call.1} parent=27 // pred_check
          %p244 = pneg %p78
        $region34: #{tpu_custom_call.1} parent=27 // pred_check_branch
          %246 = sbr.rel (%p244) target = $region36
        $region35: #{tpu_custom_call.1} parent=27 // pred_region
          %s247 = sand.u32 %s68, 1
          %s248 = scalar_lea.sflag [#allocation7], %s247
          %s249 = sand.u32 %s68, 1
          %s250 = smul.addr %s249, 192
          %s251 = scalar_lea.vmem [#allocation6], %s250
          %s252 = smul.u32 48, %s26
          %s254 = ssub.s32 3072, 3072
          %255 = vsyncadd %s248, %s254
          %s256 = sadd.s32 %s25, %s252
          %s257 = smul.addr %s256, 64
          %s258 = scalar_lea.hbm %s1, %s257
          %s259 = sshll.u32 %s251, 4
          %s260 = int_to_ptr.vmem [resolvable:$true] %s259
          %265 = dma.hbm_to_vmem [thread:$0]  %s258, 3072, %s260, %s248, 64, 64, 4
        $region36: #{tpu_custom_call.1} parent=27 // pred_fallthru
          _
      $region28: #{tpu_custom_call.1} parent=5 // pred_fallthru
        _
      %p266 = scmp.le.s32.totalorder 1, %s18
      %p267 = scmp.lt.s32.totalorder %s18, 4
      %p268 = pnand %p266, %p267
      %p269 = pneg %p268
      // Predicated region
      $region37: #{tpu_custom_call.1} parent=5 // pred_check
        _
      $region38: #{tpu_custom_call.1} parent=5 // pred_check_branch
        %271 = sbr.rel (%p268) target = $region40
      $region39: #{tpu_custom_call.1} parent=5 // pred_region
        %s272 = ssub.s32 %s18, 1
        %s273 = sand.u32 %s43, 1
        %s274 = scalar_lea.sflag [#allocation4], %s273
        %s275 = sand.u32 %s43, 1
        %s276 = smul.addr %s275, 12
        %s277 = scalar_lea.vmem [#allocation3], %s276
        // Predicated region
        $region41: #{tpu_custom_call.1} parent=39 // pred_check
          %p278 = pneg %p56
        $region42: #{tpu_custom_call.1} parent=39 // pred_check_branch
          %280 = sbr.rel (%p278) target = $region44
        $region43: #{tpu_custom_call.1} parent=39 // pred_region
          %281 = dma.done %s274, 192
        $region44: #{tpu_custom_call.1} parent=39 // pred_fallthru
          _
        %s282 = sand.u32 %s71, 1
        %s283 = scalar_lea.sflag [#allocation7], %s282
        %s284 = sand.u32 %s71, 1
        %s285 = smul.addr %s284, 192
        %s286 = scalar_lea.vmem [#allocation6], %s285
        // Predicated region
        $region45: #{tpu_custom_call.1} parent=39 // pred_check
          %p287 = pneg %p84
        $region46: #{tpu_custom_call.1} parent=39 // pred_check_branch
          %289 = sbr.rel (%p287) target = $region48
        $region47: #{tpu_custom_call.1} parent=39 // pred_region
          %290 = dma.done %s283, 3072
        $region48: #{tpu_custom_call.1} parent=39 // pred_fallthru
          _
        %s291 = sand.u32 %s43, 1
        %s292 = scalar_lea.sflag [#allocation4], %s291
        %s293 = sand.u32 %s43, 1
        %s294 = smul.addr %s293, 12
        %s295 = scalar_lea.vmem [#allocation3], %s294
        %p296 = pneg %p56
        %p297 = pneg %p53
        %s298 = sand.u32 %s71, 1
        %s299 = scalar_lea.sflag [#allocation7], %s298
        %s300 = sand.u32 %s71, 1
        %s301 = smul.addr %s300, 192
        %s302 = scalar_lea.vmem [#allocation6], %s301
        %p303 = pneg %p84
        %p304 = pneg %p81
        %p305 = scmp.lt.s32.totalorder %s27, 0
        %s306 = scalar_select %p305, %s27, 0
        %s307 = scalar_lea.vmem %s2, %s306
        %p308 = pneg %p110
        %p309 = pneg %p107
        %p310 = scmp.lt.s32.totalorder %s27, 0
        %s311 = scalar_select %p310, %s27, 0
        %s312 = scalar_lea.vmem %s3, %s311
        %p313 = pneg %p136
        %p314 = pneg %p133
        %p315 = scmp.lt.s32.totalorder %s27, 0
        %s316 = scalar_select %p315, %s27, 0
        %s317 = scalar_lea.vmem %s4, %s316
        %p318 = pneg %p162
        %p319 = pneg %p159
        %p320 = pneg %p188
        %p321 = pneg %p185
        %s322 = smul.u32 3, %s28
        %s323 = smul.u32 48, %s28
        %p324 = scmp.lt.s32.totalorder %s27, 0
        %s325 = scalar_select %p324, %s27, 0
        %s326 = scalar_lea.vmem %s2, %s325
        %p327 = scmp.lt.s32.totalorder %s27, 0
        %s328 = scalar_select %p327, %s27, 0
        %s329 = scalar_lea.vmem %s3, %s328
        %p330 = scmp.lt.s32.totalorder %s27, 0
        %s331 = scalar_select %p330, %s27, 0
        %s332 = scalar_lea.vmem %s4, %s331
        %p334 = scmp.eq.s32.totalorder %s28, 0
        // Predicated region
        $region49: #{tpu_custom_call.1} parent=39 // pred_check
          %p335 = pneg %p334
        $region50: #{tpu_custom_call.1} parent=39 // pred_check_branch
          %337 = sbr.rel (%p335) target = $region52
        $region51: #{tpu_custom_call.1} parent=39 // pred_region
          %338 = vst [vmem:[#allocation2] sm:$0xff] 0.0
        $region52: #{tpu_custom_call.1} parent=39 // pred_fallthru
          _
        %v339 = vld [vmem:[#allocation2] sm:$0xff]
        %v340 = vld [vmem:[%s277] sm:$0xff]
        %v341 = vld [vmem:[%s277 + $0x8] sm:$0xf]
        %v342 = vld [vmem:[%s286] sm:$0xf]
        %v343 = vld [vmem:[%s286 + $0x4] sm:$0xf]
        %v344 = vld [vmem:[%s286 + $0x8] sm:$0xf]
        %v345 = vld [vmem:[%s286 + $0xc] sm:$0xf]
        %v346 = vld [vmem:[%s286 + $0x10] sm:$0xf]
        %v347 = vld [vmem:[%s286 + $0x14] sm:$0xf]
        %v348 = vld [vmem:[%s286 + $0x18] sm:$0xf]
        %v349 = vld [vmem:[%s286 + $0x1c] sm:$0xf]
        %v350 = vld [vmem:[%s286 + $0x20] sm:$0xf]
        %v351 = vld [vmem:[%s286 + $0x24] sm:$0xf]
        %v352 = vld [vmem:[%s286 + $0x28] sm:$0xf]
        %v353 = vld [vmem:[%s286 + $0x2c] sm:$0xf]
        %v354 = vld [vmem:[%s286 + $0x30] sm:$0xf]
        %v355 = vld [vmem:[%s286 + $0x34] sm:$0xf]
        %v356 = vld [vmem:[%s286 + $0x38] sm:$0xf]
        %v357 = vld [vmem:[%s286 + $0x3c] sm:$0xf]
        %v358 = vld [vmem:[%s286 + $0x40] sm:$0xf]
        %v359 = vld [vmem:[%s286 + $0x44] sm:$0xf]
        %v360 = vld [vmem:[%s286 + $0x48] sm:$0xf]
        %v361 = vld [vmem:[%s286 + $0x4c] sm:$0xf]
        %v362 = vld [vmem:[%s286 + $0x50] sm:$0xf]
        %v363 = vld [vmem:[%s286 + $0x54] sm:$0xf]
        %v364 = vld [vmem:[%s286 + $0x58] sm:$0xf]
        %v365 = vld [vmem:[%s286 + $0x5c] sm:$0xf]
        %v366 = vld [vmem:[%s286 + $0x60] sm:$0xf]
        %v367 = vld [vmem:[%s286 + $0x64] sm:$0xf]
        %v368 = vld [vmem:[%s286 + $0x68] sm:$0xf]
        %v369 = vld [vmem:[%s286 + $0x6c] sm:$0xf]
        %v370 = vld [vmem:[%s286 + $0x70] sm:$0xf]
        %v371 = vld [vmem:[%s286 + $0x74] sm:$0xf]
        %v372 = vld [vmem:[%s286 + $0x78] sm:$0xf]
        %v373 = vld [vmem:[%s286 + $0x7c] sm:$0xf]
        %v374 = vld [vmem:[%s286 + $0x80] sm:$0xf]
        %v375 = vld [vmem:[%s286 + $0x84] sm:$0xf]
        %v376 = vld [vmem:[%s286 + $0x88] sm:$0xf]
        %v377 = vld [vmem:[%s286 + $0x8c] sm:$0xf]
        %v378 = vld [vmem:[%s286 + $0x90] sm:$0xf]
        %v379 = vld [vmem:[%s286 + $0x94] sm:$0xf]
        %v380 = vld [vmem:[%s286 + $0x98] sm:$0xf]
        %v381 = vld [vmem:[%s286 + $0x9c] sm:$0xf]
        %v382 = vld [vmem:[%s286 + $0xa0] sm:$0xf]
        %v383 = vld [vmem:[%s286 + $0xa4] sm:$0xf]
        %v384 = vld [vmem:[%s286 + $0xa8] sm:$0xf]
        %v385 = vld [vmem:[%s286 + $0xac] sm:$0xf]
        %v386 = vld [vmem:[%s286 + $0xb0] sm:$0xf]
        %v387 = vld [vmem:[%s286 + $0xb4] sm:$0xf]
        %v388 = vld [vmem:[%s286 + $0xb8] sm:$0xf]
        %v389 = vld [vmem:[%s286 + $0xbc] sm:$0xf]
        %v392 = vunpack.c.l.b16 %v340
        %v393 = vunpack.c.h.b16 %v340
        %v394 = vunpack.c.l.b16 %v341
        %v395 = vpack.c.b16 %v392, %v392
        %v396 = vpack.c.b16 %v393, %v393
        %v397 = vpack.c.b16 %v394, %v394
        %v449 = vunpack.c.l.b16 %v342
        %v450 = vunpack.c.l.b16 %v343
        %v451 = vunpack.c.l.b16 %v344
        %v452 = vunpack.c.l.b16 %v345
        %v453 = vunpack.c.l.b16 %v346
        %v454 = vunpack.c.l.b16 %v347
        %v455 = vunpack.c.l.b16 %v348
        %v456 = vunpack.c.l.b16 %v349
        %v457 = vunpack.c.l.b16 %v350
        %v458 = vunpack.c.l.b16 %v351
        %v459 = vunpack.c.l.b16 %v352
        %v460 = vunpack.c.l.b16 %v353
        %v461 = vunpack.c.l.b16 %v354
        %v462 = vunpack.c.l.b16 %v355
        %v463 = vunpack.c.l.b16 %v356
        %v464 = vunpack.c.l.b16 %v357
        %v465 = vunpack.c.l.b16 %v358
        %v466 = vunpack.c.l.b16 %v359
        %v467 = vunpack.c.l.b16 %v360
        %v468 = vunpack.c.l.b16 %v361
        %v469 = vunpack.c.l.b16 %v362
        %v470 = vunpack.c.l.b16 %v363
        %v471 = vunpack.c.l.b16 %v364
        %v472 = vunpack.c.l.b16 %v365
        %v473 = vunpack.c.l.b16 %v366
        %v474 = vunpack.c.l.b16 %v367
        %v475 = vunpack.c.l.b16 %v368
        %v476 = vunpack.c.l.b16 %v369
        %v477 = vunpack.c.l.b16 %v370
        %v478 = vunpack.c.l.b16 %v371
        %v479 = vunpack.c.l.b16 %v372
        %v480 = vunpack.c.l.b16 %v373
        %v481 = vunpack.c.l.b16 %v374
        %v482 = vunpack.c.l.b16 %v375
        %v483 = vunpack.c.l.b16 %v376
        %v484 = vunpack.c.l.b16 %v377
        %v485 = vunpack.c.l.b16 %v378
        %v486 = vunpack.c.l.b16 %v379
        %v487 = vunpack.c.l.b16 %v380
        %v488 = vunpack.c.l.b16 %v381
        %v489 = vunpack.c.l.b16 %v382
        %v490 = vunpack.c.l.b16 %v383
        %v491 = vunpack.c.l.b16 %v384
        %v492 = vunpack.c.l.b16 %v385
        %v493 = vunpack.c.l.b16 %v386
        %v494 = vunpack.c.l.b16 %v387
        %v495 = vunpack.c.l.b16 %v388
        %v496 = vunpack.c.l.b16 %v389
        %v497 = vpack.c.b16 %v450, %v449
        %v498 = vpack.c.b16 %v452, %v451
        %v499 = vpack.c.b16 %v454, %v453
        %v500 = vpack.c.b16 %v456, %v455
        %v501 = vpack.c.b16 %v458, %v457
        %v502 = vpack.c.b16 %v460, %v459
        %v503 = vpack.c.b16 %v462, %v461
        %v504 = vpack.c.b16 %v464, %v463
        %v505 = vpack.c.b16 %v466, %v465
        %v506 = vpack.c.b16 %v468, %v467
        %v507 = vpack.c.b16 %v470, %v469
        %v508 = vpack.c.b16 %v472, %v471
        %v509 = vpack.c.b16 %v474, %v473
        %v510 = vpack.c.b16 %v476, %v475
        %v511 = vpack.c.b16 %v478, %v477
        %v512 = vpack.c.b16 %v480, %v479
        %v513 = vpack.c.b16 %v482, %v481
        %v514 = vpack.c.b16 %v484, %v483
        %v515 = vpack.c.b16 %v486, %v485
        %v516 = vpack.c.b16 %v488, %v487
        %v517 = vpack.c.b16 %v490, %v489
        %v518 = vpack.c.b16 %v492, %v491
        %v519 = vpack.c.b16 %v494, %v493
        %v520 = vpack.c.b16 %v496, %v495
        %545 = vmatprep.subr.bf16.mxu0 0
        %546 = vmatpush1.bf16.msra.mxu0 %v497
        %547 = vmatprep.subr.bf16.mxu0 0
        %548 = vmatpush1.bf16.msra.mxu0 %v498
        %549 = vmatprep.subr.bf16.mxu0 0
        %550 = vmatpush1.bf16.msra.mxu0 %v499
        %551 = vmatprep.subr.bf16.mxu0 0
        %552 = vmatpush1.bf16.msra.mxu0 %v500
        %553 = vmatprep.subr.bf16.mxu0 0
        %554 = vmatpush1.bf16.msra.mxu0 %v501
        %555 = vmatprep.subr.bf16.mxu0 0
        %556 = vmatpush1.bf16.msra.mxu0 %v502
        %557 = vmatprep.subr.bf16.mxu0 0
        %558 = vmatpush1.bf16.msra.mxu0 %v503
        %559 = vmatprep.subr.bf16.mxu0 0
        %560 = vmatpush1.bf16.msra.mxu0 %v504
        %561 = vmatprep.subr.bf16.mxu0 0
        %562 = vmatpush1.bf16.msra.mxu0 %v505
        %563 = vmatprep.subr.bf16.mxu0 0
        %564 = vmatpush1.bf16.msra.mxu0 %v506
        %565 = vmatprep.subr.bf16.mxu0 0
        %566 = vmatpush1.bf16.msra.mxu0 %v507
        %567 = vmatprep.subr.bf16.mxu0 0
        %568 = vmatpush1.bf16.msra.mxu0 %v508
        %569 = vmatprep.subr.bf16.mxu0 0
        %570 = vmatpush1.bf16.msra.mxu0 %v509
        %571 = vmatprep.subr.bf16.mxu0 0
        %572 = vmatpush1.bf16.msra.mxu0 %v510
        %573 = vmatprep.subr.bf16.mxu0 0
        %574 = vmatpush1.bf16.msra.mxu0 %v511
        %575 = vmatprep.subr.bf16.mxu0 0
        %576 = vmatpush1.bf16.msra.mxu0 %v512
        %577 = vmatprep.mubr.bf16.mxu0 %v396
        %578 = vmatmul.mubr.bf16.gmra.mrb[0].mxu0 %v395
        %v579 = vpop.f32.mrb[0].mxu0
        %v580 = vadd.f32 0.0, %v579
        %v581 = vpop.f32.mrb[0].mxu0
        %v582 = vpop.f32.mrb[0].mxu0
        %v583 = vpop.f32.mrb[0].mxu0
        %584 = vdwg.mxu0
        %585 = vmatprep.subr.bf16.mxu0 0
        %586 = vmatpush1.bf16.msra.mxu0 %v513
        %587 = vmatprep.subr.bf16.mxu0 0
        %588 = vmatpush1.bf16.msra.mxu0 %v514
        %589 = vmatprep.subr.bf16.mxu0 0
        %590 = vmatpush1.bf16.msra.mxu0 %v515
        %591 = vmatprep.subr.bf16.mxu0 0
        %592 = vmatpush1.bf16.msra.mxu0 %v516
        %593 = vmatprep.subr.bf16.mxu0 0
        %594 = vmatpush1.bf16.msra.mxu0 %v517
        %595 = vmatprep.subr.bf16.mxu0 0
        %596 = vmatpush1.bf16.msra.mxu0 %v518
        %597 = vmatprep.subr.bf16.mxu0 0
        %598 = vmatpush1.bf16.msra.mxu0 %v519
        %599 = vmatprep.subr.bf16.mxu0 0
        %600 = vmatpush1.bf16.msra.mxu0 %v520
        %601 = vmatprep.subr.bf16.mxu0 0
        %602 = vmatpush1.bf16.msra.mxu0 0
        %603 = vmatprep.subr.bf16.mxu0 0
        %604 = vmatpush1.bf16.msra.mxu0 0
        %605 = vmatprep.subr.bf16.mxu0 0
        %606 = vmatpush1.bf16.msra.mxu0 0
        %607 = vmatprep.subr.bf16.mxu0 0
        %608 = vmatpush1.bf16.msra.mxu0 0
        %609 = vmatprep.subr.bf16.mxu0 0
        %610 = vmatpush1.bf16.msra.mxu0 0
        %611 = vmatprep.subr.bf16.mxu0 0
        %612 = vmatpush1.bf16.msra.mxu0 0
        %613 = vmatprep.subr.bf16.mxu0 0
        %614 = vmatpush1.bf16.msra.mxu0 0
        %615 = vmatprep.subr.bf16.mxu0 0
        %616 = vmatpush1.bf16.msra.mxu0 0
        %617 = vmatprep.mubr.bf16.mxu0 0
        %618 = vmatmul.mubr.bf16.gmra.mrb[0].mxu0 %v397
        %v619 = vpop.f32.mrb[0].mxu0
        %v620 = vadd.f32 %v580, %v619
        %v621 = vpop.f32.mrb[0].mxu0
        %v622 = vpop.f32.mrb[0].mxu0
        %v623 = vpop.f32.mrb[0].mxu0
        %624 = vdwg.mxu0
        %v625 = vadd.f32 %v339, %v620
        %626 = vst [vmem:[#allocation2] sm:$0xff] %v625
        %p627 = scmp.eq.s32.totalorder %s28, 2
        // Predicated region
        $region53: #{tpu_custom_call.1} parent=39 // pred_check
          %p628 = pneg %p627
        $region54: #{tpu_custom_call.1} parent=39 // pred_check_branch
          %630 = sbr.rel (%p628) target = $region56
        $region55: #{tpu_custom_call.1} parent=39 // pred_region
          %v631 = vld [vmem:[#allocation2] sm:$0xff]
          %v632 = vld [vmem:[%s326] sm:$0x1]
          %v634 = vlaneseq
          %v635 = vshrl.u32 %v634, 7
          %v636 = vsub.s32 0, %v635
          %v637 = vrot.slane %v632, %v636
          %v639 = vadd.f32 %v631, %v637
          %v640 = vrot.slane %v639, 4
          %v641 = vadd.f32 %v639, %v640
          %v642 = vrot.slane %v641, 2
          %v643 = vadd.f32 %v641, %v642
          %v644 = vrot.slane %v643, 1
          %v645 = vadd.f32 %v643, %v644
          %v646 = vmul.f32 %v645, 0.125
          %v647 = vsub.f32 %v639, %v646
          %v648 = vmul.f32 %v647, %v647
          %v649 = vrot.slane %v648, 4
          %v650 = vadd.f32 %v648, %v649
          %v651 = vrot.slane %v650, 2
          %v652 = vadd.f32 %v650, %v651
          %v653 = vrot.slane %v652, 1
          %v654 = vadd.f32 %v652, %v653
          %v655 = vmul.f32 %v654, 0.125
          %v656 = vadd.f32 %v655, 1e-05
          %v657 = vrsqrt.pop %v656
          %v658 = vmul.f32 %v647, %v657
          %v659 = vld [vmem:[%s329] sm:$0x1]
          %v661 = vlaneseq
          %v662 = vshrl.u32 %v661, 7
          %v663 = vsub.s32 0, %v662
          %v664 = vrot.slane %v659, %v663
          %v666 = vmul.f32 %v658, %v664
          %v667 = vld [vmem:[%s332] sm:$0x1]
          %v669 = vlaneseq
          %v670 = vshrl.u32 %v669, 7
          %v671 = vsub.s32 0, %v670
          %v672 = vrot.slane %v667, %v671
          %v674 = vadd.f32 %v666, %v672
          %v675 = vmax.f32 %v674, 0.0
          %676 = vst [vmem:[#allocation8] sm:$0xff] %v675
        $region56: #{tpu_custom_call.1} parent=39 // pred_fallthru
          _
        // Predicated region
        $region57: #{tpu_custom_call.1} parent=39 // pred_check
          %p677 = pneg %p185
        $region58: #{tpu_custom_call.1} parent=39 // pred_check_branch
          %679 = sbr.rel (%p677) target = $region60
        $region59: #{tpu_custom_call.1} parent=39 // pred_region
          %s681 = ssub.s32 128, 128
          %682 = vsyncadd [#allocation5], %s681
          %s683 = smul.addr %s27, 128
          %s684 = scalar_lea.hbm %s5, %s683
          %s686 = sshll.u32 [#allocation8], 4
          %s687 = int_to_ptr.vmem [resolvable:$true] %s686
          %689 = dma.vmem_to_hbm [thread:$0]  %s687, 128, %s684, [#allocation5]
        $region60: #{tpu_custom_call.1} parent=39 // pred_fallthru
          _
        // Predicated region
        $region61: #{tpu_custom_call.1} parent=39 // pred_check
          %p690 = pneg %p185
        $region62: #{tpu_custom_call.1} parent=39 // pred_check_branch
          %692 = sbr.rel (%p690) target = $region64
        $region63: #{tpu_custom_call.1} parent=39 // pred_region
          %693 = dma.done [#allocation5], 128
        $region64: #{tpu_custom_call.1} parent=39 // pred_fallthru
          _
      $region40: #{tpu_custom_call.1} parent=5 // pred_fallthru
        _
      %p694 = scmp.le.s32.totalorder 2, %s18
      // Predicated region
      $region65: #{tpu_custom_call.1} parent=5 // pred_check
        %p695 = pneg %p694
      $region66: #{tpu_custom_call.1} parent=5 // pred_check_branch
        %697 = sbr.rel (%p695) target = $region68
      $region67: #{tpu_custom_call.1} parent=5 // pred_region
        %s698 = ssub.s32 %s18, 2
      $region68: #{tpu_custom_call.1} parent=5 // pred_fallthru
        _
    $region6: #{tpu_custom_call.1} parent=1 // loop_footer
      %s22 = sadd.s32 1, %s18
    $region7: #{tpu_custom_call.1} parent=1 // loop_footer_branch
      %17 = sbr.rel target = $region3
    $region8: #{tpu_custom_call.1} parent=1 // loop_exit
      _
    %699 = vsyncpa [#allocation4], 1
    %s700 = scalar_lea.sflag [#allocation4], 1
    %701 = vsyncpa %s700, 1
    %702 = vsyncpa [#allocation7], 1
    %s703 = scalar_lea.sflag [#allocation7], 1
    %704 = vsyncpa %s703, 1
    %705 = vsyncpa [#allocation5], 1
    %s706 = scalar_lea.sflag [#allocation5], 1
    %707 = vsyncpa %s706, 1

</llo_original>
